<compile_context>
chip_gen: v7x
topology: tpu7x:2x2x1
jax: 0.10.0
libtpu: 0.0.40
codegen_flags: <defaults>
</compile_context>

<pallas_src>
import functools

import jax
import jax.numpy as jnp
from jax.experimental import pallas as pl
from jax.experimental.pallas import tpu as pltpu


def _focal_weight(one_minus_pt, gamma):
    """(1 - pt) ** gamma with cheap VALU paths for small integer gamma."""
    if gamma == 0:
        return jnp.ones_like(one_minus_pt)          # matches torch: x**0 == 1
    if float(gamma).is_integer() and 0 < gamma <= 8:
        out = one_minus_pt
        for _ in range(int(gamma) - 1):
            out = out * one_minus_pt                # integer pow: VALU only, no EUP
        return out
    # Fractional gamma: pow lowers to exp(gamma*log(x)); clamp the tiny negative
    # values that (1 - pt) can get from rounding so log() never sees a negative.
    return jnp.power(jnp.maximum(one_minus_pt, 0.0), gamma)


def _nfl_kernel(tgt_ref, x_ref, out_ref, *, gamma, n_total, block_n):
    i = pl.program_id(0)

    # Keep all math in f32 (v5e has no bf16 VPU/EUP; log-softmax wants f32 anyway).
    logits = x_ref[...].astype(jnp.float32)                     # (bn, C)
    c = logits.shape[1]

    # Stable log-softmax pieces.  exp(shifted) is computed ONCE and reused for
    # both the softmax denominator and (gamma>0) pt_all.
    m = jnp.max(logits, axis=1, keepdims=True)                  # (bn, 1)
    shifted = logits - m
    e = jnp.exp(shifted)                                        # (bn, C) -- only full-tile exp
    s = jnp.sum(e, axis=1, keepdims=True)                       # (bn, 1)
    logs = jnp.log(s)                                           # (bn, 1)

    # Gather shifted at the target class via a one-hot mask (gather -> masked reduce).
    col = jax.lax.broadcasted_iota(jnp.int32, logits.shape, 1)  # (bn, C)
    onehot = col == tgt_ref[...]                                # tgt is (bn, 1)
    shifted_t = jnp.sum(jnp.where(onehot, shifted, 0.0), axis=1, keepdims=True)
    logpt_t = shifted_t - logs                                  # (bn, 1), <= 0

    if gamma == 0:
        # normalizor = sum_c -logpt_c = C*log(s) - sum_c shifted_c
        # (logpt itself is never materialized in this path.)
        normalizor = c * logs - jnp.sum(shifted, axis=1, keepdims=True)
        loss = -logpt_t
    else:
        neg_logpt = logs - shifted                              # (bn, C) = -logpt >= 0
        pt_all = e * (1.0 / s)                                  # softmax without a 2nd exp
        focal_all = _focal_weight(1.0 - pt_all, gamma)
        normalizor = jnp.sum(focal_all * neg_logpt, axis=1, keepdims=True)
        # pt at target: cheap (bn,1) EUP exp instead of a 2nd full-tile gather.
        pt_t = jnp.exp(logpt_t)
        loss = -_focal_weight(1.0 - pt_t, gamma) * logpt_t
    loss = loss / normalizor                                    # (bn, 1); scale folded in wrapper

    # Mask rows past N (last block may be padded when N % block_n != 0).
    # jnp.where is a select, so garbage/NaN in padded rows cannot leak through.
    row = jax.lax.broadcasted_iota(jnp.int32, (block_n, 1), 0)
    valid = (row + i * block_n) < n_total
    loss = jnp.where(valid, loss, 0.0)

    blk_sum = jnp.sum(loss, axis=0, keepdims=True)              # (1, 1)

    # Lane-dense partial-sum tile: partial sum at [0, 0], zeros elsewhere.
    sub = jax.lax.broadcasted_iota(jnp.int32, (8, 128), 0)
    lane = jax.lax.broadcasted_iota(jnp.int32, (8, 128), 1)
    out_ref[...] = jnp.where((sub == 0) & (lane == 0), blk_sum, 0.0)


def _tpu_budgets():
    """Generation-aware (f32_tile_budget_bytes, vmem_limit_bytes)."""
    try:
        vmem = pltpu.get_tpu_info().vmem_capacity_bytes
    except Exception:  # noqa: BLE001 -- unknown chip / no device: stay safe everywhere
        vmem = None
    if vmem is not None and vmem <= (64 << 20):
        # v7x: 64 MiB physical VMEM -> ~4 MiB f32 tile, 48 MiB scoped limit
        # (2 double-buffered input tiles + a handful of f32 temps stay well under).
        return 4 << 20, 48 << 20
    if vmem is not None:
        # v5e / v6e: 128 MiB physical VMEM -> ~8 MiB f32 tile, 64 MiB scoped limit.
        return 8 << 20, 64 << 20
    # Unknown: conservative but far above the old 1 MiB budget; fits every gen.
    return 4 << 20, 48 << 20


def _choose_block_n(n, c, *, tile_bytes, row_align=8):
    """Largest row tile (multiple of row_align) whose f32 footprint fits tile_bytes."""
    rows_for_budget = max(row_align, tile_bytes // (c * 4))
    n_rounded = max(row_align, (n // row_align) * row_align)
    block_n = min(rows_for_budget, n_rounded)
    return max(row_align, (block_n // row_align) * row_align)


def normalized_focal_loss(logits, target, *, scale=1.0, gamma=0,
                          size_average=True, block_n=None):
    """logits: (N, C) float (f32 or bf16); target: (N,) int class indices.

    Returns scalar f32.  C == 1 gives 0/0 == NaN, same as the torch reference.
    """
    n, c = logits.shape
    tile_bytes, vmem_limit = _tpu_budgets()
    # bf16 inputs pack 16 rows per sublane-pair: align tiles to 16 so the input
    # DMA / loads stay unmasked.  f32 only needs 8.
    row_align = 16 if jnp.dtype(logits.dtype).itemsize == 2 else 8
    if block_n is None:
        block_n = _choose_block_n(n, c, tile_bytes=tile_bytes, row_align=row_align)
    num_blocks = pl.cdiv(n, block_n)
    target2d = target.reshape(n, 1).astype(jnp.int32)

    kernel = functools.partial(_nfl_kernel, gamma=gamma, n_total=n,
                               block_n=block_n)

    partials = pl.pallas_call(
        kernel,
        out_shape=jax.ShapeDtypeStruct((num_blocks * 8, 128), jnp.float32),
        grid_spec=pltpu.PrefetchScalarGridSpec(
            num_scalar_prefetch=0,
            grid=(num_blocks,),
            in_specs=[
                pl.BlockSpec((block_n, 1), lambda i: (i, 0)),   # target
                pl.BlockSpec((block_n, c), lambda i: (i, 0)),   # logits
            ],
            out_specs=pl.BlockSpec((8, 128), lambda i: (i, 0)), # per-block partial
        ),
        compiler_params=pltpu.CompilerParams(
            # Independent per-block partial sums; switch to CORE_PARALLEL /
            # core_map only if a v7x profile shows one TensorCore idle.
            dimension_semantics=("parallel",),
            vmem_limit_bytes=vmem_limit),
    )(target2d, logits)

    total = jnp.sum(partials) * jnp.float32(scale)
    if size_average:
        total = total / jnp.float32(n)
    return total


def _reference(logits, target, *, scale=1.0, gamma=0, size_average=True):
    logpt = jax.nn.log_softmax(logits.astype(jnp.float32), axis=1)
    focal = (1.0 - jnp.exp(logpt)) ** gamma
    normalizor = jnp.sum(-focal * logpt, axis=1)
    logpt_t = jnp.take_along_axis(logpt, target.reshape(-1, 1), axis=1).reshape(-1)
    pt = jnp.exp(logpt_t)
    loss = -((1.0 - pt) ** gamma) * logpt_t
    loss = scale * loss / normalizor
    return loss.mean() if size_average else loss.sum()


if __name__ == "__main__":
    num_classes = 16
    n = 64

    key = jax.random.PRNGKey(0)
    k1, k2 = jax.random.split(key)
    logits = jax.random.normal(k1, (n, num_classes), dtype=jnp.float32)
    target = jax.random.randint(k2, (n,), 0, num_classes, dtype=jnp.int32)

    # Default module config: gamma=0, scale=1.0, size_average=True.
    out = normalized_focal_loss(logits, target, scale=1.0, gamma=0,
                                size_average=True)
    out = jax.block_until_ready(out)
    ref = _reference(logits, target, scale=1.0, gamma=0, size_average=True)
    assert jnp.allclose(out, ref, rtol=1e-5, atol=1e-5), (out, ref)

    # gamma=2 with N not a multiple of the row tile: exercises the integer-gamma
    # focal weights, the exp(logpt_t) path, and the partial-block row masking.
    n2 = 50
    logits2 = jax.random.normal(k1, (n2, num_classes), dtype=jnp.float32)
    target2 = jax.random.randint(k2, (n2,), 0, num_classes, dtype=jnp.int32)
    out2 = normalized_focal_loss(logits2, target2, scale=2.0, gamma=2,
                                 size_average=False)
    out2 = jax.block_until_ready(out2)
    ref2 = _reference(logits2, target2, scale=2.0, gamma=2, size_average=False)
    assert jnp.allclose(out2, ref2, rtol=1e-5, atol=1e-5), (out2, ref2)

    # bf16 logits (bandwidth-saver path, esp. v5e): kernel upcasts in-register,
    # so it must match the f32 reference run on the same bf16-quantized values.
    logits3 = logits.astype(jnp.bfloat16)
    out3 = normalized_focal_loss(logits3, target, scale=1.0, gamma=2,
                                 size_average=True)
    out3 = jax.block_until_ready(out3)
    ref3 = _reference(logits3.astype(jnp.float32), target, scale=1.0, gamma=2,
                      size_average=True)
    assert jnp.allclose(out3, ref3, rtol=1e-5, atol=1e-5), (out3, ref3)

    print("KERNEL_OK")
</pallas_src>

<mosaic_0001>
module attributes {stable_mosaic.version = 11 : i64} {
  func.func @_nfl_kernel(%arg0: i32, %arg1: memref<64x1xi32, #tpu.memory_space<vmem>>, %arg2: memref<64x16xf32, #tpu.memory_space<vmem>>, %arg3: memref<8x128xf32, #tpu.memory_space<vmem>>) attributes {dimension_semantics = [#tpu.dimension_semantics<parallel>], iteration_bounds = array<i64: 1>, scalar_prefetch = 0 : i64, scratch_operands = 0 : i64, tpu.core_type = #tpu.core_type<tc>, window_params = [{transform_indices = @transform_0, window_bounds = array<i64: 64, 1>}, {transform_indices = @transform_1, window_bounds = array<i64: 64, 16>}, {transform_indices = @transform_2, window_bounds = array<i64: 8, 128>}]} {
    %c0 = arith.constant 0 : index
    %c0_0 = arith.constant 0 : index
    %0 = vector.load %arg2[%c0, %c0_0] : memref<64x16xf32, #tpu.memory_space<vmem>>, vector<64x16xf32>
    %cst = arith.constant dense<0xFF800000> : vector<64xf32>
    %1 = vector.multi_reduction <maximumf>, %0, %cst [1] : vector<64x16xf32> to vector<64xf32>
    %2 = vector.shape_cast %1 : vector<64xf32> to vector<64x1xf32>
    %3 = vector.broadcast %2 : vector<64x1xf32> to vector<64x16xf32>
    %4 = arith.subf %0, %3 : vector<64x16xf32>
    %5 = math.exp %4 : vector<64x16xf32>
    %cst_1 = arith.constant dense<0.000000e+00> : vector<64xf32>
    %6 = vector.multi_reduction <add>, %5, %cst_1 [1] : vector<64x16xf32> to vector<64xf32>
    %7 = vector.shape_cast %6 : vector<64xf32> to vector<64x1xf32>
    %8 = math.log %7 : vector<64x1xf32>
    %9 = tpu.iota {dimensions = array<i32: 1>} : vector<64x16xi32>
    %c0_2 = arith.constant 0 : index
    %c0_3 = arith.constant 0 : index
    %10 = vector.load %arg1[%c0_2, %c0_3] : memref<64x1xi32, #tpu.memory_space<vmem>>, vector<64x1xi32>
    %11 = vector.broadcast %10 : vector<64x1xi32> to vector<64x16xi32>
    %12 = arith.cmpi eq, %9, %11 : vector<64x16xi32>
    %cst_4 = arith.constant 0.000000e+00 : f32
    %13 = vector.broadcast %cst_4 : f32 to vector<64x16xf32>
    %14 = arith.select %12, %4, %13 : vector<64x16xi1>, vector<64x16xf32>
    %cst_5 = arith.constant dense<0.000000e+00> : vector<64xf32>
    %15 = vector.multi_reduction <add>, %14, %cst_5 [1] : vector<64x16xf32> to vector<64xf32>
    %16 = vector.shape_cast %15 : vector<64xf32> to vector<64x1xf32>
    %17 = arith.subf %16, %8 : vector<64x1xf32>
    %cst_6 = arith.constant 1.600000e+01 : f32
    %18 = vector.broadcast %cst_6 : f32 to vector<64x1xf32>
    %19 = arith.mulf %18, %8 : vector<64x1xf32>
    %cst_7 = arith.constant dense<0.000000e+00> : vector<64xf32>
    %20 = vector.multi_reduction <add>, %4, %cst_7 [1] : vector<64x16xf32> to vector<64xf32>
    %21 = vector.shape_cast %20 : vector<64xf32> to vector<64x1xf32>
    %22 = arith.subf %19, %21 : vector<64x1xf32>
    %cst_8 = arith.constant 0.000000e+00 : f32
    %23 = vector.broadcast %cst_8 : f32 to vector<64x1xf32>
    %24 = arith.subf %23, %17 : vector<64x1xf32>
    %25 = arith.divf %24, %22 : vector<64x1xf32>
    %26 = tpu.iota {dimensions = array<i32: 0>} : vector<64x1xi32>
    %c64_i32 = arith.constant 64 : i32
    %27 = arith.muli %arg0, %c64_i32 : i32
    %28 = vector.broadcast %27 : i32 to vector<64x1xi32>
    %29 = arith.addi %26, %28 : vector<64x1xi32>
    %c64_i32_9 = arith.constant 64 : i32
    %30 = vector.broadcast %c64_i32_9 : i32 to vector<64x1xi32>
    %31 = arith.cmpi slt, %29, %30 : vector<64x1xi32>
    %cst_10 = arith.constant 0.000000e+00 : f32
    %32 = vector.broadcast %cst_10 : f32 to vector<64x1xf32>
    %33 = arith.select %31, %25, %32 : vector<64x1xi1>, vector<64x1xf32>
    %cst_11 = arith.constant dense<0.000000e+00> : vector<1xf32>
    %34 = vector.multi_reduction <add>, %33, %cst_11 [0] : vector<64x1xf32> to vector<1xf32>
    %35 = vector.shape_cast %34 : vector<1xf32> to vector<1x1xf32>
    %36 = tpu.iota {dimensions = array<i32: 0>} : vector<8x128xi32>
    %37 = tpu.iota {dimensions = array<i32: 1>} : vector<8x128xi32>
    %c0_i32 = arith.constant 0 : i32
    %38 = vector.broadcast %c0_i32 : i32 to vector<8x128xi32>
    %39 = arith.cmpi eq, %36, %38 : vector<8x128xi32>
    %c0_i32_12 = arith.constant 0 : i32
    %40 = vector.broadcast %c0_i32_12 : i32 to vector<8x128xi32>
    %41 = arith.cmpi eq, %37, %40 : vector<8x128xi32>
    %42 = arith.andi %39, %41 : vector<8x128xi1>
    %cst_13 = arith.constant 0.000000e+00 : f32
    %43 = vector.shape_cast %35 : vector<1x1xf32> to vector<1x1xf32>
    %44 = vector.broadcast %43 : vector<1x1xf32> to vector<8x128xf32>
    %45 = vector.broadcast %cst_13 : f32 to vector<8x128xf32>
    %46 = arith.select %42, %44, %45 : vector<8x128xi1>, vector<8x128xf32>
    %c0_14 = arith.constant 0 : index
    %c0_15 = arith.constant 0 : index
    %47 = vector.load %arg3[%c0_14, %c0_15] : memref<8x128xf32, #tpu.memory_space<vmem>>, vector<8x128xf32>
    tpu.vector_store %arg3[%c0_14, %c0_15], %46 {strides = array<i32>} : memref<8x128xf32, #tpu.memory_space<vmem>>, vector<8x128xf32>,
    return
  }
  func.func @transform_0(%arg0: i32) -> (i32, i32) {
    %c0_i32 = arith.constant 0 : i32
    %c0_i32_0 = arith.constant 0 : i32
    return %arg0, %c0_i32 : i32, i32
  }
  func.func @transform_1(%arg0: i32) -> (i32, i32) {
    %c0_i32 = arith.constant 0 : i32
    %c0_i32_0 = arith.constant 0 : i32
    return %arg0, %c0_i32 : i32, i32
  }
  func.func @transform_2(%arg0: i32) -> (i32, i32) {
    %c0_i32 = arith.constant 0 : i32
    %c0_i32_0 = arith.constant 0 : i32
    return %arg0, %c0_i32 : i32, i32
  }
}

</mosaic_0001>

<llo_original>
// kernel: tpu_custom_call.1
$region0: #{tpu_custom_call.1}
  #allocation0 [shape = 'u32[]', space=smem, size = 0x4, offset = 0x4, fixed_abs, tag = 'smem constant byte address 0x4 - core index']
  #allocation1 [shape = 'u32[144,128]{1,0:T(1,128)}', space=vmem, size = 0x12000, scoped, tag = 'internal scratch']
  %s0 = inlined_call_operand.vmem [shape: s32[64,1], index: 0, kind: input, shape index: {}]
  %s1 = inlined_call_operand.vmem [shape: f32[64,16], index: 1, kind: input, shape index: {}]
  %s2 = inlined_call_operand.hbm [shape: f32[8,128], index: 2, kind: output, shape index: {}]
  %s3 = sld [smem:[#allocation0]]
  $region18: #{tpu_custom_call.1} parent=0
    _
  %s5 = ssub.s32 1, %s3
  %s6 = scalar_select 0, %s5, %s3
  $region1: #{tpu_custom_call.1} parent=0
    #allocation2 [shape = 'u8[4096]{0}', space=vmem, size = 0x1000, scoped, tag = 'output window, operand 0, single buffered']
    #allocation3 [shape = 's32[1]{0}', space=sflag, size = 0x4, scoped, tag = 'scoped memory for tpu_custom_call.1']
    %7 = vsyncpa [#allocation3], 0
    // Predicated region
    $region2: #{tpu_custom_call.1} parent=1 // pred_check
      _
    $region3: #{tpu_custom_call.1} parent=1 // pred_check_branch
      %9 = sbr.rel (0) target = $region5
    $region4: #{tpu_custom_call.1} parent=1 // pred_region
      _
    $region5: #{tpu_custom_call.1} parent=1 // pred_fallthru
      _
    // Predicated region
    $region6: #{tpu_custom_call.1} parent=1 // pred_check
      _
    $region7: #{tpu_custom_call.1} parent=1 // pred_check_branch
      %11 = sbr.rel (0) target = $region9
    $region8: #{tpu_custom_call.1} parent=1 // pred_region
      _
    $region9: #{tpu_custom_call.1} parent=1 // pred_fallthru
      _
    %v12 = vld [vmem:[%s1] sm:$0xff]
    %v13 = vld [vmem:[%s1 + $0x8] sm:$0xff]
    %v14 = vld [vmem:[%s1 + $0x10] sm:$0xff]
    %v15 = vld [vmem:[%s1 + $0x18] sm:$0xff]
    %v16 = vld [vmem:[%s1 + $0x20] sm:$0xff]
    %v17 = vld [vmem:[%s1 + $0x28] sm:$0xff]
    %v18 = vld [vmem:[%s1 + $0x30] sm:$0xff]
    %v19 = vld [vmem:[%s1 + $0x38] sm:$0xff]
    %vm20 = vcmask 130048
    %v21 = vsel %vm20, %v12, -inf
    %22 = vmax.xlane.f32.xlu0 %v21
    %v23 = vpop.xlane.xlu0 %22
    %v24 = vsel %vm20, %v13, -inf
    %25 = vmax.xlane.f32.xlu0 %v24
    %v26 = vpop.xlane.xlu0 %25
    %v27 = vsel %vm20, %v14, -inf
    %28 = vmax.xlane.f32.xlu0 %v27
    %v29 = vpop.xlane.xlu0 %28
    %v30 = vsel %vm20, %v15, -inf
    %31 = vmax.xlane.f32.xlu0 %v30
    %v32 = vpop.xlane.xlu0 %31
    %v33 = vsel %vm20, %v16, -inf
    %34 = vmax.xlane.f32.xlu0 %v33
    %v35 = vpop.xlane.xlu0 %34
    %v36 = vsel %vm20, %v17, -inf
    %37 = vmax.xlane.f32.xlu0 %v36
    %v38 = vpop.xlane.xlu0 %37
    %v39 = vsel %vm20, %v18, -inf
    %40 = vmax.xlane.f32.xlu0 %v39
    %v41 = vpop.xlane.xlu0 %40
    %v42 = vsel %vm20, %v19, -inf
    %43 = vmax.xlane.f32.xlu0 %v42
    %v44 = vpop.xlane.xlu0 %43
    %v45 = vsub.f32 %v12, %v23
    %v46 = vsub.f32 %v13, %v26
    %v47 = vsub.f32 %v14, %v29
    %v48 = vsub.f32 %v15, %v32
    %v49 = vsub.f32 %v16, %v35
    %v50 = vsub.f32 %v17, %v38
    %v51 = vsub.f32 %v18, %v41
    %v52 = vsub.f32 %v19, %v44
    %v53 = vmul.f32 %v45, 1.442695
    %v54 = vpow.pop %v53
    %v55 = vmul.f32 %v46, 1.442695
    %v56 = vpow.pop %v55
    %v57 = vmul.f32 %v47, 1.442695
    %v58 = vpow.pop %v57
    %v59 = vmul.f32 %v48, 1.442695
    %v60 = vpow.pop %v59
    %v61 = vmul.f32 %v49, 1.442695
    %v62 = vpow.pop %v61
    %v63 = vmul.f32 %v50, 1.442695
    %v64 = vpow.pop %v63
    %v65 = vmul.f32 %v51, 1.442695
    %v66 = vpow.pop %v65
    %v67 = vmul.f32 %v52, 1.442695
    %v68 = vpow.pop %v67
    %v69 = vsel %vm20, %v54, 0.0
    %70 = vadd.xlane.f32.xlu0 %v69
    %v71 = vpop.xlane.xlu0 %70
    %v72 = vsel %vm20, %v56, 0.0
    %73 = vadd.xlane.f32.xlu0 %v72
    %v74 = vpop.xlane.xlu0 %73
    %v75 = vsel %vm20, %v58, 0.0
    %76 = vadd.xlane.f32.xlu0 %v75
    %v77 = vpop.xlane.xlu0 %76
    %v78 = vsel %vm20, %v60, 0.0
    %79 = vadd.xlane.f32.xlu0 %v78
    %v80 = vpop.xlane.xlu0 %79
    %v81 = vsel %vm20, %v62, 0.0
    %82 = vadd.xlane.f32.xlu0 %v81
    %v83 = vpop.xlane.xlu0 %82
    %v84 = vsel %vm20, %v64, 0.0
    %85 = vadd.xlane.f32.xlu0 %v84
    %v86 = vpop.xlane.xlu0 %85
    %v87 = vsel %vm20, %v66, 0.0
    %88 = vadd.xlane.f32.xlu0 %v87
    %v89 = vpop.xlane.xlu0 %88
    %v90 = vsel %vm20, %v68, 0.0
    %91 = vadd.xlane.f32.xlu0 %v90
    %v92 = vpop.xlane.xlu0 %91
    %v93 = vlog2.pop %v71
    %v94 = vmul.f32 %v93, 0.6931472
    %v95 = vlog2.pop %v74
    %v96 = vmul.f32 %v95, 0.6931472
    %v97 = vlog2.pop %v77
    %v98 = vmul.f32 %v97, 0.6931472
    %v99 = vlog2.pop %v80
    %v100 = vmul.f32 %v99, 0.6931472
    %v101 = vlog2.pop %v83
    %v102 = vmul.f32 %v101, 0.6931472
    %v103 = vlog2.pop %v86
    %v104 = vmul.f32 %v103, 0.6931472
    %v105 = vlog2.pop %v89
    %v106 = vmul.f32 %v105, 0.6931472
    %v107 = vlog2.pop %v92
    %v108 = vmul.f32 %v107, 0.6931472
    %v109 = vlaneseq
    %v110 = vand.u32 %v109, 127
    %v111 = vld [vmem:[%s0] sm:$0xff]
    %v112 = vld [vmem:[%s0 + $0x8] sm:$0xff]
    %v113 = vld [vmem:[%s0 + $0x10] sm:$0xff]
    %v114 = vld [vmem:[%s0 + $0x18] sm:$0xff]
    %v115 = vld [vmem:[%s0 + $0x20] sm:$0xff]
    %v116 = vld [vmem:[%s0 + $0x28] sm:$0xff]
    %v117 = vld [vmem:[%s0 + $0x30] sm:$0xff]
    %v118 = vld [vmem:[%s0 + $0x38] sm:$0xff]
    %119 = vset.pattern.permute.xlu0 0
    %120 = vperm.xlu0 %119, %v111
    %v121 = vpop.permute.xlu0 %120
    %122 = vset.pattern.permute.xlu0 0
    %123 = vperm.xlu0 %122, %v112
    %v124 = vpop.permute.xlu0 %123
    %125 = vset.pattern.permute.xlu0 0
    %126 = vperm.xlu0 %125, %v113
    %v127 = vpop.permute.xlu0 %126
    %128 = vset.pattern.permute.xlu0 0
    %129 = vperm.xlu0 %128, %v114
    %v130 = vpop.permute.xlu0 %129
    %131 = vset.pattern.permute.xlu0 0
    %132 = vperm.xlu0 %131, %v115
    %v133 = vpop.permute.xlu0 %132
    %134 = vset.pattern.permute.xlu0 0
    %135 = vperm.xlu0 %134, %v116
    %v136 = vpop.permute.xlu0 %135
    %137 = vset.pattern.permute.xlu0 0
    %138 = vperm.xlu0 %137, %v117
    %v139 = vpop.permute.xlu0 %138
    %140 = vset.pattern.permute.xlu0 0
    %141 = vperm.xlu0 %140, %v118
    %v142 = vpop.permute.xlu0 %141
    %vm143 = vcmp.eq.s32.totalorder %v110, %v121
    %vm144 = vcmp.eq.s32.totalorder %v110, %v124
    %vm145 = vcmp.eq.s32.totalorder %v110, %v127
    %vm146 = vcmp.eq.s32.totalorder %v110, %v130
    %vm147 = vcmp.eq.s32.totalorder %v110, %v133
    %vm148 = vcmp.eq.s32.totalorder %v110, %v136
    %vm149 = vcmp.eq.s32.totalorder %v110, %v139
    %vm150 = vcmp.eq.s32.totalorder %v110, %v142
    %v151 = vsel %vm143, %v45, 0.0
    %v152 = vsel %vm144, %v46, 0.0
    %v153 = vsel %vm145, %v47, 0.0
    %v154 = vsel %vm146, %v48, 0.0
    %v155 = vsel %vm147, %v49, 0.0
    %v156 = vsel %vm148, %v50, 0.0
    %v157 = vsel %vm149, %v51, 0.0
    %v158 = vsel %vm150, %v52, 0.0
    %v159 = vsel %vm20, %v151, 0.0
    %160 = vadd.xlane.f32.xlu0 %v159
    %v161 = vpop.xlane.xlu0 %160
    %v162 = vsel %vm20, %v152, 0.0
    %163 = vadd.xlane.f32.xlu0 %v162
    %v164 = vpop.xlane.xlu0 %163
    %v165 = vsel %vm20, %v153, 0.0
    %166 = vadd.xlane.f32.xlu0 %v165
    %v167 = vpop.xlane.xlu0 %166
    %v168 = vsel %vm20, %v154, 0.0
    %169 = vadd.xlane.f32.xlu0 %v168
    %v170 = vpop.xlane.xlu0 %169
    %v171 = vsel %vm20, %v155, 0.0
    %172 = vadd.xlane.f32.xlu0 %v171
    %v173 = vpop.xlane.xlu0 %172
    %v174 = vsel %vm20, %v156, 0.0
    %175 = vadd.xlane.f32.xlu0 %v174
    %v176 = vpop.xlane.xlu0 %175
    %v177 = vsel %vm20, %v157, 0.0
    %178 = vadd.xlane.f32.xlu0 %v177
    %v179 = vpop.xlane.xlu0 %178
    %v180 = vsel %vm20, %v158, 0.0
    %181 = vadd.xlane.f32.xlu0 %v180
    %v182 = vpop.xlane.xlu0 %181
    %v183 = vsub.f32 %v161, %v94
    %v184 = vsub.f32 %v164, %v96
    %v185 = vsub.f32 %v167, %v98
    %v186 = vsub.f32 %v170, %v100
    %v187 = vsub.f32 %v173, %v102
    %v188 = vsub.f32 %v176, %v104
    %v189 = vsub.f32 %v179, %v106
    %v190 = vsub.f32 %v182, %v108
    %v191 = vmul.f32 %v94, 16.0
    %v192 = vmul.f32 %v96, 16.0
    %v193 = vmul.f32 %v98, 16.0
    %v194 = vmul.f32 %v100, 16.0
    %v195 = vmul.f32 %v102, 16.0
    %v196 = vmul.f32 %v104, 16.0
    %v197 = vmul.f32 %v106, 16.0
    %v198 = vmul.f32 %v108, 16.0
    %v199 = vsel %vm20, %v45, 0.0
    %200 = vadd.xlane.f32.xlu0 %v199
    %v201 = vpop.xlane.xlu0 %200
    %v202 = vsel %vm20, %v46, 0.0
    %203 = vadd.xlane.f32.xlu0 %v202
    %v204 = vpop.xlane.xlu0 %203
    %v205 = vsel %vm20, %v47, 0.0
    %206 = vadd.xlane.f32.xlu0 %v205
    %v207 = vpop.xlane.xlu0 %206
    %v208 = vsel %vm20, %v48, 0.0
    %209 = vadd.xlane.f32.xlu0 %v208
    %v210 = vpop.xlane.xlu0 %209
    %v211 = vsel %vm20, %v49, 0.0
    %212 = vadd.xlane.f32.xlu0 %v211
    %v213 = vpop.xlane.xlu0 %212
    %v214 = vsel %vm20, %v50, 0.0
    %215 = vadd.xlane.f32.xlu0 %v214
    %v216 = vpop.xlane.xlu0 %215
    %v217 = vsel %vm20, %v51, 0.0
    %218 = vadd.xlane.f32.xlu0 %v217
    %v219 = vpop.xlane.xlu0 %218
    %v220 = vsel %vm20, %v52, 0.0
    %221 = vadd.xlane.f32.xlu0 %v220
    %v222 = vpop.xlane.xlu0 %221
    %v223 = vsub.f32 %v191, %v201
    %v224 = vsub.f32 %v192, %v204
    %v225 = vsub.f32 %v193, %v207
    %v226 = vsub.f32 %v194, %v210
    %v227 = vsub.f32 %v195, %v213
    %v228 = vsub.f32 %v196, %v216
    %v229 = vsub.f32 %v197, %v219
    %v230 = vsub.f32 %v198, %v222
    %v231 = vsub.f32 0.0, %v183
    %v232 = vsub.f32 0.0, %v184
    %v233 = vsub.f32 0.0, %v185
    %v234 = vsub.f32 0.0, %v186
    %v235 = vsub.f32 0.0, %v187
    %v236 = vsub.f32 0.0, %v188
    %v237 = vsub.f32 0.0, %v189
    %v238 = vsub.f32 0.0, %v190
    %v239 = vrcp.pop %v223
    %v240 = vmul.f32 %v231, %v239
    %v241 = vrcp.pop %v224
    %v242 = vmul.f32 %v232, %v241
    %v243 = vrcp.pop %v225
    %v244 = vmul.f32 %v233, %v243
    %v245 = vrcp.pop %v226
    %v246 = vmul.f32 %v234, %v245
    %v247 = vrcp.pop %v227
    %v248 = vmul.f32 %v235, %v247
    %v249 = vrcp.pop %v228
    %v250 = vmul.f32 %v236, %v249
    %v251 = vrcp.pop %v229
    %v252 = vmul.f32 %v237, %v251
    %v253 = vrcp.pop %v230
    %v254 = vmul.f32 %v238, %v253
    %v255 = vlaneseq
    %v256 = vshrl.u32 %v255, 7
    %v257 = vadd.s32 %v256, 8
    %v258 = vadd.s32 %v256, 16
    %v259 = vadd.s32 %v256, 24
    %v260 = vadd.s32 %v256, 32
    %v261 = vadd.s32 %v256, 40
    %v262 = vadd.s32 %v256, 48
    %v263 = vadd.s32 %v256, 56
    %s264 = smul.u32 0, 64
    %v265 = vstv %s264
    %v266 = vadd.s32 %v256, %v265
    %v267 = vadd.s32 %v257, %v265
    %v268 = vadd.s32 %v258, %v265
    %v269 = vadd.s32 %v259, %v265
    %v270 = vadd.s32 %v260, %v265
    %v271 = vadd.s32 %v261, %v265
    %v272 = vadd.s32 %v262, %v265
    %v273 = vadd.s32 %v263, %v265
    %vm274 = vcmp.lt.s32.totalorder %v266, 64
    %vm275 = vcmp.lt.s32.totalorder %v267, 64
    %vm276 = vcmp.lt.s32.totalorder %v268, 64
    %vm277 = vcmp.lt.s32.totalorder %v269, 64
    %vm278 = vcmp.lt.s32.totalorder %v270, 64
    %vm279 = vcmp.lt.s32.totalorder %v271, 64
    %vm280 = vcmp.lt.s32.totalorder %v272, 64
    %vm281 = vcmp.lt.s32.totalorder %v273, 64
    %v282 = vsel %vm274, %v240, 0.0
    %v283 = vsel %vm275, %v242, 0.0
    %v284 = vsel %vm276, %v244, 0.0
    %v285 = vsel %vm277, %v246, 0.0
    %v286 = vsel %vm278, %v248, 0.0
    %v287 = vsel %vm279, %v250, 0.0
    %v288 = vsel %vm280, %v252, 0.0
    %v289 = vsel %vm281, %v254, 0.0
    %v290 = vadd.f32 %v282, %v283
    %v291 = vadd.f32 %v290, %v284
    %v292 = vadd.f32 %v291, %v285
    %v293 = vadd.f32 %v292, %v286
    %v294 = vadd.f32 %v293, %v287
    %v295 = vadd.f32 %v294, %v288
    %v296 = vadd.f32 %v295, %v289
    %v297 = vrot.slane %v296, 4
    %v298 = vadd.f32 %v296, %v297
    %v299 = vrot.slane %v298, 2
    %v300 = vadd.f32 %v298, %v299
    %v301 = vrot.slane %v300, 1
    %v302 = vadd.f32 %v300, %v301
    %vm303 = vcmp.eq.s32.totalorder %v256, 0
    %vm304 = vcmp.eq.s32.totalorder %v110, 0
    %vm305 = vmand %vm303, %vm304
    %v306 = vsel %vm305, %v302, 0.0
    %307 = vst [vmem:[#allocation2] sm:$0xff] %v306
    // Predicated region
    $region10: #{tpu_custom_call.1} parent=1 // pred_check
      _
    $region11: #{tpu_custom_call.1} parent=1 // pred_check_branch
      %309 = sbr.rel (0) target = $region13
    $region12: #{tpu_custom_call.1} parent=1 // pred_region
      %s311 = ssub.s32 128, 128
      %312 = vsyncadd [#allocation3], %s311
      %s314 = sshll.u32 [#allocation2], 4
      %s315 = int_to_ptr.vmem [resolvable:$true] %s314
      %317 = dma.vmem_to_hbm [thread:$0]  %s315, 128, %s2, [#allocation3]
    $region13: #{tpu_custom_call.1} parent=1 // pred_fallthru
      _
    // Predicated region
    $region14: #{tpu_custom_call.1} parent=1 // pred_check
      _
    $region15: #{tpu_custom_call.1} parent=1 // pred_check_branch
      %319 = sbr.rel (0) target = $region17
    $region16: #{tpu_custom_call.1} parent=1 // pred_region
      %320 = dma.done [#allocation3], 128
    $region17: #{tpu_custom_call.1} parent=1 // pred_fallthru
      _
    %321 = vsyncpa [#allocation3], 1

</llo_original>
